<compile_context>
chip_gen: v6e
topology: v6e:2x2x1
jax: 0.10.0
libtpu: 0.0.40
codegen_flags: <defaults>
</compile_context>

<pallas_src>
import jax
import jax.numpy as jnp
from jax.experimental import pallas as pl
from jax.experimental.pallas import tpu as pltpu

# thumos / num_classes == 21 class weights from the PyTorch module __init__
THUMOS21_WEIGHTS = [
    0.00391679, 1.0, 0.17611259, 0.38874895, 0.18483034, 0.25923852,
    0.37368846, 0.38680033, 0.07342214, 0.37795918, 0.34864458, 0.07959429,
    0.09210265, 0.09197457, 0.09747368, 0.11823289, 0.31909028, 0.52914286,
    0.70903522, 0.20893502, 0.36399371,
]


def _nll_kernel(iota_ref, w_ref, logits_ref, tgt_ref,
                loss_ref, wsum_ref, acc_logit, acc_cnt):
    """One grid step = one (tile, C_dense) lane-densified tile of samples."""
    step = pl.program_id(1)

    @pl.when(step == 0)
    def _():
        acc_logit[...] = jnp.zeros_like(acc_logit)
        acc_cnt[...] = jnp.zeros_like(acc_cnt)

    lane = iota_ref[...]        # (1, c_dense) int32, resident (constant index_map)
    logits = logits_ref[...]    # (tile, c_dense) f32 log-probs, 6 samples / row
    tgt = tgt_ref[...]          # (tile, g) int32 absolute target-lane indices

    # One-hot over dense lanes: g compares OR'd. Each target lane lives in its
    # own 21-lane segment so the masks are disjoint.  Padded / invalid rows
    # carry lane index c_dense, which never matches -> they contribute nothing.
    groups = tgt.shape[1]
    match = lane == tgt[:, 0:1]
    for k in range(1, groups):
        match = match | (lane == tgt[:, k:k + 1])

    # where-based selection (no onehot * logits -> no 0 * (-inf) NaN hazard)
    sel = jnp.where(match, logits, 0.0)       # logit at target, else 0
    cnt = match.astype(jnp.float32)           # 1 at target lane, else 0

    # Defer the cross-lane reduce: collapse only the (tile//8) vreg groups with
    # plain vector adds into an (8, c_dense) accumulator.
    tile, cd = logits.shape
    acc_logit[...] += jnp.sum(sel.reshape(tile // 8, 8, cd), axis=0)
    acc_cnt[...] += jnp.sum(cnt.reshape(tile // 8, 8, cd), axis=0)

    @pl.when(step == pl.num_programs(1) - 1)
    def _():
        # Apply class weights once, then do the single cross-lane reduction.
        w = w_ref[...]                         # (1, c_dense) weights per lane
        loss_ref[...] = (-jnp.sum(acc_logit[...] * w)).reshape(1, 1)
        wsum_ref[...] = jnp.sum(acc_cnt[...] * w).reshape(1, 1)


def weighted_nll_loss(logits, targets, weights, reduction="mean",
                      tile_rows=2048, num_cores=1):
    """Pallas implementation of nn.NLLLoss(weight=weights, reduction=...).

    tile_rows  : dense rows (each = `g` samples) per grid step.
    num_cores  : set to 2 on v7x to split the row range across both
                 TensorCores; 1 (default) on single-TC v5e/v6e.
    """
    n, c = logits.shape
    g = max(1, 128 // c)            # samples folded per dense row (6 for C=21)
    c_dense = g * c                 # 126 dense lanes for C=21

    # Round sample count up so dense rows are a multiple of 8 sublanes, the
    # tile size, and the core count.
    dense_needed = -(-n // g)
    dense_needed = -(-dense_needed // 8) * 8
    tile_rows = max(8, min((tile_rows // 8) * 8, dense_needed))
    n_tiles = -(-dense_needed // tile_rows)
    n_tiles = -(-n_tiles // num_cores) * num_cores
    dense_rows = n_tiles * tile_rows
    n_pad = dense_rows * g
    steps = n_tiles // num_cores

    logits = logits.astype(jnp.float32)
    targets = targets.astype(jnp.int32)
    if n_pad != n:
        logits = jnp.pad(logits, ((0, n_pad - n), (0, 0)))
        targets = jnp.pad(targets, ((0, n_pad - n),), constant_values=-1)

    # Absolute dense-lane index of each sample's target: (i % g) * C + class.
    # Padded / out-of-range targets map to lane c_dense -> never matched.
    # TODO(synk): PyTorch errors on out-of-range targets and supports
    # ignore_index; here invalid targets are silently dropped from both sums.
    subrow_base = (jnp.arange(n_pad, dtype=jnp.int32) % g) * c
    valid = (targets >= 0) & (targets < c)
    tgt_lane = jnp.where(valid, subrow_base + targets, c_dense)
    tgt_lane = tgt_lane.reshape(dense_rows, g)

    # Free reshape of the contiguous row-major logits into the dense layout.
    logits_dense = logits.reshape(dense_rows, c_dense)

    lane_iota = jnp.arange(c_dense, dtype=jnp.int32).reshape(1, c_dense)
    weights = jnp.asarray(weights, jnp.float32)
    w_dense = jnp.tile(weights, (g,)).reshape(1, c_dense)

    cost = pl.CostEstimate(
        flops=12 * dense_rows * c_dense,
        transcendentals=0,
        bytes_accessed=dense_rows * c_dense * 4 + dense_rows * g * 4
                       + 2 * c_dense * 4 + 2 * num_cores * 4,
    )

    loss_parts, wsum_parts = pl.pallas_call(
        _nll_kernel,
        out_shape=(
            jax.ShapeDtypeStruct((num_cores, 1), jnp.float32),
            jax.ShapeDtypeStruct((num_cores, 1), jnp.float32),
        ),
        grid_spec=pltpu.PrefetchScalarGridSpec(
            num_scalar_prefetch=0,
            grid=(num_cores, steps),
            in_specs=[
                pl.BlockSpec((1, c_dense), lambda cc, i: (0, 0)),   # lane iota (resident)
                pl.BlockSpec((1, c_dense), lambda cc, i: (0, 0)),   # class weights (resident)
                pl.BlockSpec((tile_rows, c_dense),
                             lambda cc, i: (cc * steps + i, 0)),    # logits tile
                pl.BlockSpec((tile_rows, g),
                             lambda cc, i: (cc * steps + i, 0)),    # target lanes tile
            ],
            out_specs=[
                pl.BlockSpec((1, 1), lambda cc, i: (cc, 0)),        # per-core loss sum
                pl.BlockSpec((1, 1), lambda cc, i: (cc, 0)),        # per-core weight sum
            ],
            scratch_shapes=[
                pltpu.VMEM((8, c_dense), jnp.float32),              # logit-sum accumulator
                pltpu.VMEM((8, c_dense), jnp.float32),              # hit-count accumulator
            ],
        ),
        compiler_params=pltpu.CompilerParams(
            dimension_semantics=("parallel", "arbitrary")),
        cost_estimate=cost,
    )(lane_iota, w_dense, logits_dense, tgt_lane)

    loss_sum = jnp.sum(loss_parts)
    w_sum = jnp.sum(wsum_parts)
    if reduction == "mean":
        return loss_sum / w_sum
    elif reduction == "sum":
        return loss_sum
    else:
        raise NotImplementedError(
            "# TODO(synk): reduction='none' (per-row vector output) not wired up")


if __name__ == "__main__":
    num_classes = 21                      # thumos / 21 -> weighted NLL
    b, l = 2, 8
    n = b * l                             # flattened b*l rows

    key = jax.random.PRNGKey(0)
    k1, k2 = jax.random.split(key)
    raw = jax.random.normal(k1, (n, num_classes), dtype=jnp.float32)
    logits = jax.nn.log_softmax(raw, axis=-1)       # NLLLoss expects log-probs
    targets = jax.random.randint(k2, (n,), 0, num_classes, dtype=jnp.int32)
    weights = jnp.array(THUMOS21_WEIGHTS, dtype=jnp.float32)

    loss = weighted_nll_loss(logits, targets, weights, reduction="mean")
    loss = jax.block_until_ready(loss)

    # pure-JAX reference check (same semantics as torch.nn.NLLLoss)
    picked = logits[jnp.arange(n), targets]
    w_t = weights[targets]
    ref = jnp.sum(-w_t * picked) / jnp.sum(w_t)
    assert jnp.allclose(loss, ref, rtol=1e-5, atol=1e-6), (loss, ref)

    print("KERNEL_OK")
</pallas_src>

<mosaic_0001>
module attributes {stable_mosaic.version = 11 : i64} {
  func.func @_nll_kernel(%arg0: i32, %arg1: i32, %arg2: memref<1x126xi32, #tpu.memory_space<vmem>>, %arg3: memref<1x126xf32, #tpu.memory_space<vmem>>, %arg4: memref<8x126xf32, #tpu.memory_space<vmem>>, %arg5: memref<8x6xi32, #tpu.memory_space<vmem>>, %arg6: memref<1x1xf32, #tpu.memory_space<vmem>>, %arg7: memref<1x1xf32, #tpu.memory_space<vmem>>, %arg8: memref<8x126xf32, #tpu.memory_space<vmem>>, %arg9: memref<8x126xf32, #tpu.memory_space<vmem>>) attributes {dimension_semantics = [#tpu.dimension_semantics<parallel>, #tpu.dimension_semantics<arbitrary>], iteration_bounds = array<i64: 1, 1>, scalar_prefetch = 0 : i64, scratch_operands = 2 : i64, tpu.core_type = #tpu.core_type<tc>, window_params = [{pipeline_mode = #tpu.pipeline_mode<synchronous>, transform_indices = @transform_0, window_bounds = array<i64: 1, 126>}, {pipeline_mode = #tpu.pipeline_mode<synchronous>, transform_indices = @transform_1, window_bounds = array<i64: 1, 126>}, {transform_indices = @transform_2, window_bounds = array<i64: 8, 126>}, {transform_indices = @transform_3, window_bounds = array<i64: 8, 6>}, {transform_indices = @transform_4, window_bounds = array<i64: 1, 1>}, {transform_indices = @transform_5, window_bounds = array<i64: 1, 1>}]} {
    %c0_i32 = arith.constant 0 : i32
    %0 = arith.cmpi eq, %arg1, %c0_i32 : i32
    %1 = arith.extui %0 : i1 to i32
    %c0_i32_0 = arith.constant 0 : i32
    %2 = arith.cmpi ne, %1, %c0_i32_0 : i32
    scf.if %2 {
      %cst_18 = arith.constant 0.000000e+00 : f32
      %52 = vector.broadcast %cst_18 : f32 to vector<8x126xf32>
      %c0_19 = arith.constant 0 : index
      %c0_20 = arith.constant 0 : index
      %53 = vector.load %arg8[%c0_19, %c0_20] : memref<8x126xf32, #tpu.memory_space<vmem>>, vector<8x126xf32>
      tpu.vector_store %arg8[%c0_19, %c0_20], %52 {strides = array<i32>} : memref<8x126xf32, #tpu.memory_space<vmem>>, vector<8x126xf32>,
      %cst_21 = arith.constant 0.000000e+00 : f32
      %54 = vector.broadcast %cst_21 : f32 to vector<8x126xf32>
      %c0_22 = arith.constant 0 : index
      %c0_23 = arith.constant 0 : index
      %55 = vector.load %arg9[%c0_22, %c0_23] : memref<8x126xf32, #tpu.memory_space<vmem>>, vector<8x126xf32>
      tpu.vector_store %arg9[%c0_22, %c0_23], %54 {strides = array<i32>} : memref<8x126xf32, #tpu.memory_space<vmem>>, vector<8x126xf32>,
    } else {
    }
    %c0 = arith.constant 0 : index
    %c0_1 = arith.constant 0 : index
    %3 = vector.load %arg2[%c0, %c0_1] : memref<1x126xi32, #tpu.memory_space<vmem>>, vector<1x126xi32>
    %c0_2 = arith.constant 0 : index
    %c0_3 = arith.constant 0 : index
    %4 = vector.load %arg4[%c0_2, %c0_3] : memref<8x126xf32, #tpu.memory_space<vmem>>, vector<8x126xf32>
    %c0_4 = arith.constant 0 : index
    %c0_5 = arith.constant 0 : index
    %5 = vector.load %arg5[%c0_4, %c0_5] : memref<8x6xi32, #tpu.memory_space<vmem>>, vector<8x6xi32>
    %6 = vector.extract_strided_slice %5 {offsets = [0, 0], sizes = [8, 1], strides = [1, 1]} : vector<8x6xi32> to vector<8x1xi32>
    %7 = vector.broadcast %3 : vector<1x126xi32> to vector<8x126xi32>
    %8 = vector.broadcast %6 : vector<8x1xi32> to vector<8x126xi32>
    %9 = arith.cmpi eq, %7, %8 : vector<8x126xi32>
    %10 = vector.extract_strided_slice %5 {offsets = [0, 1], sizes = [8, 1], strides = [1, 1]} : vector<8x6xi32> to vector<8x1xi32>
    %11 = vector.broadcast %3 : vector<1x126xi32> to vector<8x126xi32>
    %12 = vector.broadcast %10 : vector<8x1xi32> to vector<8x126xi32>
    %13 = arith.cmpi eq, %11, %12 : vector<8x126xi32>
    %14 = arith.ori %9, %13 : vector<8x126xi1>
    %15 = vector.extract_strided_slice %5 {offsets = [0, 2], sizes = [8, 1], strides = [1, 1]} : vector<8x6xi32> to vector<8x1xi32>
    %16 = vector.broadcast %3 : vector<1x126xi32> to vector<8x126xi32>
    %17 = vector.broadcast %15 : vector<8x1xi32> to vector<8x126xi32>
    %18 = arith.cmpi eq, %16, %17 : vector<8x126xi32>
    %19 = arith.ori %14, %18 : vector<8x126xi1>
    %20 = vector.extract_strided_slice %5 {offsets = [0, 3], sizes = [8, 1], strides = [1, 1]} : vector<8x6xi32> to vector<8x1xi32>
    %21 = vector.broadcast %3 : vector<1x126xi32> to vector<8x126xi32>
    %22 = vector.broadcast %20 : vector<8x1xi32> to vector<8x126xi32>
    %23 = arith.cmpi eq, %21, %22 : vector<8x126xi32>
    %24 = arith.ori %19, %23 : vector<8x126xi1>
    %25 = vector.extract_strided_slice %5 {offsets = [0, 4], sizes = [8, 1], strides = [1, 1]} : vector<8x6xi32> to vector<8x1xi32>
    %26 = vector.broadcast %3 : vector<1x126xi32> to vector<8x126xi32>
    %27 = vector.broadcast %25 : vector<8x1xi32> to vector<8x126xi32>
    %28 = arith.cmpi eq, %26, %27 : vector<8x126xi32>
    %29 = arith.ori %24, %28 : vector<8x126xi1>
    %30 = vector.extract_strided_slice %5 {offsets = [0, 5], sizes = [8, 1], strides = [1, 1]} : vector<8x6xi32> to vector<8x1xi32>
    %31 = vector.broadcast %3 : vector<1x126xi32> to vector<8x126xi32>
    %32 = vector.broadcast %30 : vector<8x1xi32> to vector<8x126xi32>
    %33 = arith.cmpi eq, %31, %32 : vector<8x126xi32>
    %34 = arith.ori %29, %33 : vector<8x126xi1>
    %cst = arith.constant 0.000000e+00 : f32
    %35 = vector.broadcast %cst : f32 to vector<8x126xf32>
    %36 = arith.select %34, %4, %35 : vector<8x126xi1>, vector<8x126xf32>
    %37 = arith.extui %34 : vector<8x126xi1> to vector<8x126xi32>
    %38 = arith.sitofp %37 : vector<8x126xi32> to vector<8x126xf32>
    %c0_6 = arith.constant 0 : index
    %c0_7 = arith.constant 0 : index
    %39 = vector.load %arg8[%c0_6, %c0_7] : memref<8x126xf32, #tpu.memory_space<vmem>>, vector<8x126xf32>
    %40 = vector.shape_cast %36 : vector<8x126xf32> to vector<1x8x126xf32>
    %cst_8 = arith.constant dense<0.000000e+00> : vector<8x126xf32>
    %41 = vector.multi_reduction <add>, %40, %cst_8 [0] : vector<1x8x126xf32> to vector<8x126xf32>
    %42 = arith.addf %39, %41 : vector<8x126xf32>
    %c0_9 = arith.constant 0 : index
    %c0_10 = arith.constant 0 : index
    %43 = vector.load %arg8[%c0_9, %c0_10] : memref<8x126xf32, #tpu.memory_space<vmem>>, vector<8x126xf32>
    tpu.vector_store %arg8[%c0_9, %c0_10], %42 {strides = array<i32>} : memref<8x126xf32, #tpu.memory_space<vmem>>, vector<8x126xf32>,
    %c0_11 = arith.constant 0 : index
    %c0_12 = arith.constant 0 : index
    %44 = vector.load %arg9[%c0_11, %c0_12] : memref<8x126xf32, #tpu.memory_space<vmem>>, vector<8x126xf32>
    %45 = vector.shape_cast %38 : vector<8x126xf32> to vector<1x8x126xf32>
    %cst_13 = arith.constant dense<0.000000e+00> : vector<8x126xf32>
    %46 = vector.multi_reduction <add>, %45, %cst_13 [0] : vector<1x8x126xf32> to vector<8x126xf32>
    %47 = arith.addf %44, %46 : vector<8x126xf32>
    %c0_14 = arith.constant 0 : index
    %c0_15 = arith.constant 0 : index
    %48 = vector.load %arg9[%c0_14, %c0_15] : memref<8x126xf32, #tpu.memory_space<vmem>>, vector<8x126xf32>
    tpu.vector_store %arg9[%c0_14, %c0_15], %47 {strides = array<i32>} : memref<8x126xf32, #tpu.memory_space<vmem>>, vector<8x126xf32>,
    %c0_i32_16 = arith.constant 0 : i32
    %49 = arith.cmpi eq, %arg1, %c0_i32_16 : i32
    %50 = arith.extui %49 : i1 to i32
    %c0_i32_17 = arith.constant 0 : i32
    %51 = arith.cmpi ne, %50, %c0_i32_17 : i32
    scf.if %51 {
      %c0_18 = arith.constant 0 : index
      %c0_19 = arith.constant 0 : index
      %52 = vector.load %arg3[%c0_18, %c0_19] : memref<1x126xf32, #tpu.memory_space<vmem>>, vector<1x126xf32>
      %c0_20 = arith.constant 0 : index
      %c0_21 = arith.constant 0 : index
      %53 = vector.load %arg8[%c0_20, %c0_21] : memref<8x126xf32, #tpu.memory_space<vmem>>, vector<8x126xf32>
      %54 = vector.broadcast %52 : vector<1x126xf32> to vector<8x126xf32>
      %55 = arith.mulf %53, %54 : vector<8x126xf32>
      %56 = vector.shape_cast %55 : vector<8x126xf32> to vector<1x8x126xf32>
      %cst_22 = arith.constant dense<0.000000e+00> : vector<1xf32>
      %57 = vector.multi_reduction <add>, %56, %cst_22 [1, 2] : vector<1x8x126xf32> to vector<1xf32>
      %58 = vector.shape_cast %57 : vector<1xf32> to vector<1x1x1xf32>
      %59 = vector.extract %58[0, 0, 0] : f32 from vector<1x1x1xf32>
      %cst_23 = arith.constant 0.000000e+00 : f32
      %60 = arith.subf %cst_23, %59 : f32
      %61 = vector.broadcast %60 : f32 to vector<1x1xf32>
      %c0_24 = arith.constant 0 : index
      %c0_25 = arith.constant 0 : index
      %62 = vector.load %arg6[%c0_24, %c0_25] : memref<1x1xf32, #tpu.memory_space<vmem>>, vector<1x1xf32>
      tpu.vector_store %arg6[%c0_24, %c0_25], %61 {strides = array<i32>} : memref<1x1xf32, #tpu.memory_space<vmem>>, vector<1x1xf32>,
      %c0_26 = arith.constant 0 : index
      %c0_27 = arith.constant 0 : index
      %63 = vector.load %arg9[%c0_26, %c0_27] : memref<8x126xf32, #tpu.memory_space<vmem>>, vector<8x126xf32>
      %64 = vector.broadcast %52 : vector<1x126xf32> to vector<8x126xf32>
      %65 = arith.mulf %63, %64 : vector<8x126xf32>
      %66 = vector.shape_cast %65 : vector<8x126xf32> to vector<1x8x126xf32>
      %cst_28 = arith.constant dense<0.000000e+00> : vector<1xf32>
      %67 = vector.multi_reduction <add>, %66, %cst_28 [1, 2] : vector<1x8x126xf32> to vector<1xf32>
      %68 = vector.shape_cast %67 : vector<1xf32> to vector<1x1x1xf32>
      %69 = vector.extract %68[0, 0, 0] : f32 from vector<1x1x1xf32>
      %70 = vector.broadcast %69 : f32 to vector<1x1xf32>
      %c0_29 = arith.constant 0 : index
      %c0_30 = arith.constant 0 : index
      %71 = vector.load %arg7[%c0_29, %c0_30] : memref<1x1xf32, #tpu.memory_space<vmem>>, vector<1x1xf32>
      tpu.vector_store %arg7[%c0_29, %c0_30], %70 {strides = array<i32>} : memref<1x1xf32, #tpu.memory_space<vmem>>, vector<1x1xf32>,
    } else {
    }
    return
  }
  func.func @transform_0(%arg0: i32, %arg1: i32) -> (i32, i32) {
    %c0_i32 = arith.constant 0 : i32
    %c0_i32_0 = arith.constant 0 : i32
    %c0_i32_1 = arith.constant 0 : i32
    return %c0_i32, %c0_i32_0 : i32, i32
  }
  func.func @transform_1(%arg0: i32, %arg1: i32) -> (i32, i32) {
    %c0_i32 = arith.constant 0 : i32
    %c0_i32_0 = arith.constant 0 : i32
    %c0_i32_1 = arith.constant 0 : i32
    return %c0_i32, %c0_i32_0 : i32, i32
  }
  func.func @transform_2(%arg0: i32, %arg1: i32) -> (i32, i32) {
    %c1_i32 = arith.constant 1 : i32
    %0 = arith.muli %arg0, %c1_i32 : i32
    %1 = arith.addi %0, %arg1 : i32
    %c0_i32 = arith.constant 0 : i32
    %c0_i32_0 = arith.constant 0 : i32
    return %1, %c0_i32 : i32, i32
  }
  func.func @transform_3(%arg0: i32, %arg1: i32) -> (i32, i32) {
    %c1_i32 = arith.constant 1 : i32
    %0 = arith.muli %arg0, %c1_i32 : i32
    %1 = arith.addi %0, %arg1 : i32
    %c0_i32 = arith.constant 0 : i32
    %c0_i32_0 = arith.constant 0 : i32
    return %1, %c0_i32 : i32, i32
  }
  func.func @transform_4(%arg0: i32, %arg1: i32) -> (i32, i32) {
    %c0_i32 = arith.constant 0 : i32
    %c0_i32_0 = arith.constant 0 : i32
    return %arg0, %c0_i32 : i32, i32
  }
  func.func @transform_5(%arg0: i32, %arg1: i32) -> (i32, i32) {
    %c0_i32 = arith.constant 0 : i32
    %c0_i32_0 = arith.constant 0 : i32
    return %arg0, %c0_i32 : i32, i32
  }
}

</mosaic_0001>

<llo_original>
// kernel: tpu_custom_call.1
$region0: #{tpu_custom_call.1}
  #allocation0 [shape = 'u32[]', space=smem, size = 0x4, offset = 0x4, fixed_abs, tag = 'smem constant byte address 0x4 - core index']
  #allocation1 [shape = 'u32[144,128]{1,0:T(1,128)}', space=vmem, size = 0x12000, scoped, tag = 'internal scratch']
  #allocation2 [shape = 'f32[8,126]{1,0:T(8,128)}', space=vmem, size = 0x1000, scoped, tag = 'scratch operand']
  #allocation3 [shape = 'f32[8,126]{1,0:T(8,128)}', space=vmem, size = 0x1000, scoped, tag = 'scratch operand']
  %s0 = inlined_call_operand.hbm [shape: s32[1,126], index: 0, kind: input, shape index: {}]
  %s1 = inlined_call_operand.vmem [shape: f32[1,126], index: 1, kind: input, shape index: {}]
  %s2 = inlined_call_operand.hbm [shape: f32[8,126], index: 2, kind: input, shape index: {}]
  %s3 = inlined_call_operand.hbm [shape: s32[8,6], index: 3, kind: input, shape index: {}]
  %s4 = inlined_call_operand.hbm [shape: f32[1,1], index: 4, kind: output, shape index: {0}]
  %s5 = inlined_call_operand.hbm [shape: f32[1,1], index: 5, kind: output, shape index: {1}]
  %6 = xla_tuple %s4, %s5
  %s7 = sld [smem:[#allocation0]]
  $region54: #{tpu_custom_call.1} parent=0
    _
  %s9 = ssub.s32 1, %s7
  %s10 = scalar_select 0, %s9, %s7
  $region1: #{tpu_custom_call.1} parent=0
    #allocation4 [shape = 'u8[512]{0}', space=vmem, size = 0x400, scoped, tag = 'input window, operand 0, single buffered']
    #allocation5 [shape = 's32[1]{0}', space=sflag, size = 0x4, scoped, tag = 'scoped memory for tpu_custom_call.1']
    #allocation6 [shape = 's32[1]{0}', space=sflag, size = 0x4, scoped, tag = 'scoped memory for tpu_custom_call.1']
    #allocation7 [shape = 'u8[4096]{0}', space=vmem, size = 0x1000, scoped, tag = 'input window, operand 2, single buffered']
    #allocation8 [shape = 's32[1]{0}', space=sflag, size = 0x4, scoped, tag = 'scoped memory for tpu_custom_call.1']
    #allocation9 [shape = 'u8[4096]{0}', space=vmem, size = 0x1000, scoped, tag = 'input window, operand 3, single buffered']
    #allocation10 [shape = 'u8[512]{0}', space=vmem, size = 0x400, scoped, tag = 'output window, operand 0, single buffered']
    #allocation11 [shape = 'u8[512]{0}', space=vmem, size = 0x400, scoped, tag = 'output window, operand 1, single buffered']
    #allocation12 [shape = 's32[1]{0}', space=sflag, size = 0x4, scoped, tag = 'scoped memory for tpu_custom_call.1']
    %11 = vsyncpa [#allocation5], 0
    %12 = vsyncpa [#allocation8], 0
    %13 = vsyncpa [#allocation6], 0
    %14 = vsyncpa [#allocation12], 0
    // Predicated region
    $region2: #{tpu_custom_call.1} parent=1 // pred_check
      _
    $region3: #{tpu_custom_call.1} parent=1 // pred_check_branch
      %16 = sbr.rel (0) target = $region5
    $region4: #{tpu_custom_call.1} parent=1 // pred_region
      %s18 = ssub.s32 16, 16
      %19 = vsyncadd [#allocation5], %s18
      %s21 = sshll.u32 [#allocation4], 4
      %s22 = int_to_ptr.vmem [resolvable:$true] %s21
      %24 = dma.hbm_to_vmem [thread:$0]  %s0, 16, %s22, [#allocation5]
    $region5: #{tpu_custom_call.1} parent=1 // pred_fallthru
      _
    // Predicated region
    $region6: #{tpu_custom_call.1} parent=1 // pred_check
      _
    $region7: #{tpu_custom_call.1} parent=1 // pred_check_branch
      %26 = sbr.rel (0) target = $region9
    $region8: #{tpu_custom_call.1} parent=1 // pred_region
      _
    $region9: #{tpu_custom_call.1} parent=1 // pred_fallthru
      _
    // Predicated region
    $region10: #{tpu_custom_call.1} parent=1 // pred_check
      _
    $region11: #{tpu_custom_call.1} parent=1 // pred_check_branch
      %28 = sbr.rel (0) target = $region13
    $region12: #{tpu_custom_call.1} parent=1 // pred_region
      %s29 = sadd.s32 0, 0
      %s31 = ssub.s32 128, 128
      %32 = vsyncadd [#allocation8], %s31
      %s33 = smul.addr %s29, 128
      %s34 = scalar_lea.hbm %s2, %s33
      %s36 = sshll.u32 [#allocation7], 4
      %s37 = int_to_ptr.vmem [resolvable:$true] %s36
      %39 = dma.hbm_to_vmem [thread:$0]  %s34, 128, %s37, [#allocation8]
    $region13: #{tpu_custom_call.1} parent=1 // pred_fallthru
      _
    // Predicated region
    $region14: #{tpu_custom_call.1} parent=1 // pred_check
      _
    $region15: #{tpu_custom_call.1} parent=1 // pred_check_branch
      %41 = sbr.rel (0) target = $region17
    $region16: #{tpu_custom_call.1} parent=1 // pred_region
      %s42 = sadd.s32 0, 0
      %s44 = ssub.s32 128, 128
      %45 = vsyncadd [#allocation8], %s44
      %s46 = smul.addr %s42, 128
      %s47 = scalar_lea.hbm %s3, %s46
      %s49 = sshll.u32 [#allocation9], 4
      %s50 = int_to_ptr.vmem [resolvable:$true] %s49
      %52 = dma.hbm_to_vmem [thread:$0]  %s47, 128, %s50, [#allocation8]
    $region17: #{tpu_custom_call.1} parent=1 // pred_fallthru
      _
    // Predicated region
    $region18: #{tpu_custom_call.1} parent=1 // pred_check
      _
    $region19: #{tpu_custom_call.1} parent=1 // pred_check_branch
      %54 = sbr.rel (0) target = $region21
    $region20: #{tpu_custom_call.1} parent=1 // pred_region
      %55 = dma.done [#allocation5], 16
    $region21: #{tpu_custom_call.1} parent=1 // pred_fallthru
      _
    // Predicated region
    $region22: #{tpu_custom_call.1} parent=1 // pred_check
      _
    $region23: #{tpu_custom_call.1} parent=1 // pred_check_branch
      %57 = sbr.rel (0) target = $region25
    $region24: #{tpu_custom_call.1} parent=1 // pred_region
      %58 = dma.done [#allocation8], 128
    $region25: #{tpu_custom_call.1} parent=1 // pred_fallthru
      _
    // Predicated region
    $region26: #{tpu_custom_call.1} parent=1 // pred_check
      _
    $region27: #{tpu_custom_call.1} parent=1 // pred_check_branch
      %60 = sbr.rel (0) target = $region29
    $region28: #{tpu_custom_call.1} parent=1 // pred_region
      %61 = dma.done [#allocation8], 128
    $region29: #{tpu_custom_call.1} parent=1 // pred_fallthru
      _
    %s62 = sadd.s32 0, 0
    %s63 = sadd.s32 0, 0
    %p64 = scmp.eq.s32.totalorder 0, 0
    // Predicated region
    $region30: #{tpu_custom_call.1} parent=1 // pred_check
      %p65 = pneg %p64
    $region31: #{tpu_custom_call.1} parent=1 // pred_check_branch
      %67 = sbr.rel (%p65) target = $region33
    $region32: #{tpu_custom_call.1} parent=1 // pred_region
      %vm68 = vcmask 1031168
      %69 = vst.msk [vmem:[#allocation2] sm:$0xff] %vm68, 0.0
      %70 = vst.msk [vmem:[#allocation3] sm:$0xff] %vm68, 0.0
    $region33: #{tpu_custom_call.1} parent=1 // pred_fallthru
      _
    %v71 = vld [vmem:[#allocation4] sm:$0x1]
    %v72 = vld [vmem:[#allocation7] sm:$0xff]
    %v73 = vld [vmem:[#allocation9] sm:$0xff]
    %v74 = vlaneseq
    %v75 = vshrl.u32 %v74, 7
    %v76 = vsub.s32 0, %v75
    %v77 = vrot.slane %v71, %v76
    %78 = vset.pattern.permute.xlu0 0
    %79 = vperm.xlu0 %78, %v73
    %v80 = vpop.permute.xlu0 %79
    %vm81 = vcmp.eq.s32.totalorder %v77, %v80
    %82 = vset.pattern.permute.xlu0 1
    %83 = vperm.xlu0 %82, %v73
    %v84 = vpop.permute.xlu0 %83
    %vm85 = vcmp.eq.s32.totalorder %v77, %v84
    %vm86 = vmor %vm81, %vm85
    %87 = vset.pattern.permute.xlu0 2
    %88 = vperm.xlu0 %87, %v73
    %v89 = vpop.permute.xlu0 %88
    %vm90 = vcmp.eq.s32.totalorder %v77, %v89
    %vm91 = vmor %vm86, %vm90
    %92 = vset.pattern.permute.xlu0 3
    %93 = vperm.xlu0 %92, %v73
    %v94 = vpop.permute.xlu0 %93
    %vm95 = vcmp.eq.s32.totalorder %v77, %v94
    %vm96 = vmor %vm91, %vm95
    %97 = vset.pattern.permute.xlu0 4
    %98 = vperm.xlu0 %97, %v73
    %v99 = vpop.permute.xlu0 %98
    %vm100 = vcmp.eq.s32.totalorder %v77, %v99
    %vm101 = vmor %vm96, %vm100
    %102 = vset.pattern.permute.xlu0 5
    %103 = vperm.xlu0 %102, %v73
    %v104 = vpop.permute.xlu0 %103
    %vm105 = vcmp.eq.s32.totalorder %v77, %v104
    %vm106 = vmor %vm101, %vm105
    %v107 = vsel %vm106, %v72, 0.0
    %v108 = vsel %vm106, 1, 0
    %v109 = vcvt.s32.f32 %v108
    %v110 = vld [vmem:[#allocation2] sm:$0xff]
    %v111 = vadd.f32 %v107, 0.0
    %v112 = vadd.f32 %v110, %v111
    %vm113 = vcmask 1031168
    %114 = vst.msk [vmem:[#allocation2] sm:$0xff] %vm113, %v112
    %v115 = vld [vmem:[#allocation3] sm:$0xff]
    %v116 = vadd.f32 %v109, 0.0
    %v117 = vadd.f32 %v115, %v116
    %118 = vst.msk [vmem:[#allocation3] sm:$0xff] %vm113, %v117
    // Predicated region
    $region34: #{tpu_custom_call.1} parent=1 // pred_check
      %p119 = pneg %p64
    $region35: #{tpu_custom_call.1} parent=1 // pred_check_branch
      %121 = sbr.rel (%p119) target = $region37
    $region36: #{tpu_custom_call.1} parent=1 // pred_region
      %v122 = vld [vmem:[%s1] sm:$0x1]
      %v123 = vld [vmem:[#allocation2] sm:$0xff]
      %v125 = vlaneseq
      %v126 = vshrl.u32 %v125, 7
      %v127 = vsub.s32 0, %v126
      %v128 = vrot.slane %v122, %v127
      %v130 = vmul.f32 %v123, %v128
      %v131 = vsel %vm113, %v130, 0.0
      %132 = vadd.xlane.f32.xlu0 %v131
      %v133 = vpop.xlane.xlu0 %132
      %v134 = vrot.slane %v133, 4
      %v135 = vadd.f32 %v133, %v134
      %v136 = vrot.slane %v135, 2
      %v137 = vadd.f32 %v135, %v136
      %v138 = vrot.slane %v137, 1
      %v139 = vadd.f32 %v137, %v138
      %s140 = vtos %v139
      %s141 = ssub.f32 0.0, %s140
      %v142 = vstv %s141
      %vm143 = vcmask 0
      %144 = vst.msk [vmem:[#allocation10] sm:$0x1] %vm143, %v142
      %v145 = vld [vmem:[#allocation3] sm:$0xff]
      %v146 = vmul.f32 %v145, %v128
      %v147 = vsel %vm113, %v146, 0.0
      %148 = vadd.xlane.f32.xlu0 %v147
      %v149 = vpop.xlane.xlu0 %148
      %v150 = vrot.slane %v149, 4
      %v151 = vadd.f32 %v149, %v150
      %v152 = vrot.slane %v151, 2
      %v153 = vadd.f32 %v151, %v152
      %v154 = vrot.slane %v153, 1
      %v155 = vadd.f32 %v153, %v154
      %s156 = vtos %v155
      %v157 = vstv %s156
      %158 = vst.msk [vmem:[#allocation11] sm:$0x1] %vm143, %v157
    $region37: #{tpu_custom_call.1} parent=1 // pred_fallthru
      _
    // Predicated region
    $region38: #{tpu_custom_call.1} parent=1 // pred_check
      _
    $region39: #{tpu_custom_call.1} parent=1 // pred_check_branch
      %160 = sbr.rel (0) target = $region41
    $region40: #{tpu_custom_call.1} parent=1 // pred_region
      %s162 = ssub.s32 16, 16
      %163 = vsyncadd [#allocation6], %s162
      %s165 = sshll.u32 [#allocation10], 4
      %s166 = int_to_ptr.vmem [resolvable:$true] %s165
      %168 = dma.vmem_to_hbm [thread:$0]  %s166, 16, %s4, [#allocation6]
    $region41: #{tpu_custom_call.1} parent=1 // pred_fallthru
      _
    // Predicated region
    $region42: #{tpu_custom_call.1} parent=1 // pred_check
      _
    $region43: #{tpu_custom_call.1} parent=1 // pred_check_branch
      %170 = sbr.rel (0) target = $region45
    $region44: #{tpu_custom_call.1} parent=1 // pred_region
      %s172 = ssub.s32 16, 16
      %173 = vsyncadd [#allocation12], %s172
      %s175 = sshll.u32 [#allocation11], 4
      %s176 = int_to_ptr.vmem [resolvable:$true] %s175
      %178 = dma.vmem_to_hbm [thread:$0]  %s176, 16, %s5, [#allocation12]
    $region45: #{tpu_custom_call.1} parent=1 // pred_fallthru
      _
    // Predicated region
    $region46: #{tpu_custom_call.1} parent=1 // pred_check
      _
    $region47: #{tpu_custom_call.1} parent=1 // pred_check_branch
      %180 = sbr.rel (0) target = $region49
    $region48: #{tpu_custom_call.1} parent=1 // pred_region
      %181 = dma.done [#allocation6], 16
    $region49: #{tpu_custom_call.1} parent=1 // pred_fallthru
      _
    // Predicated region
    $region50: #{tpu_custom_call.1} parent=1 // pred_check
      _
    $region51: #{tpu_custom_call.1} parent=1 // pred_check_branch
      %183 = sbr.rel (0) target = $region53
    $region52: #{tpu_custom_call.1} parent=1 // pred_region
      %184 = dma.done [#allocation12], 16
    $region53: #{tpu_custom_call.1} parent=1 // pred_fallthru
      _
    %185 = vsyncpa [#allocation5], 1
    %186 = vsyncpa [#allocation8], 1
    %187 = vsyncpa [#allocation6], 1
    %188 = vsyncpa [#allocation12], 1

</llo_original>
